<compile_context>
chip_gen: v7x
topology: tpu7x:2x2x1
jax: 0.10.0
libtpu: 0.0.40
codegen_flags: <defaults>
</compile_context>

<pallas_src>
import functools

import jax
import jax.numpy as jnp
import numpy as np
from jax.experimental import pallas as pl
from jax.experimental.pallas import tpu as pltpu


# --------------------------------------------------------------------------
# Kernel: one dense GEMM + bias + ReLU on lane-dense rows.
# --------------------------------------------------------------------------
def _conv_relu_kernel(x_ref, w_ref, b_ref, o_ref):
    # x_ref : (N*Ho, KH*W*Cin)   bf16 im2row slab
    # w_ref : (KH*W*Cin, Wo*Cout) bf16 block-Toeplitz weights (lane-dense cols)
    # b_ref : (1, Wo*Cout)        f32 bias tiled to the output layout
    # o_ref : (N*Ho, Wo*Cout)     f32 lane-dense output rows
    acc = jnp.dot(x_ref[...], w_ref[...], preferred_element_type=jnp.float32)
    acc = acc + jnp.broadcast_to(b_ref[...], acc.shape)
    o_ref[...] = jnp.maximum(acc, 0.0).astype(o_ref.dtype)   # NL='relu'


# --------------------------------------------------------------------------
# One-time (per-weight) parameter preparation — hoisted out of the forward.
# --------------------------------------------------------------------------
def make_conv2d_relu_params(w_oihw, bias, H, W, *, same_padding=True,
                            stride=1, dilation=1, operand_dtype=jnp.bfloat16):
    """Precompute the im2row block-Toeplitz weight matrix and tiled bias row.

    Valid for the SASNet configuration: odd square kernel, stride=1,
    dilation=1 ('same' padding formula (k-1)//2).
    """
    Cout, Cin, KH, KW = w_oihw.shape
    assert KH == KW and KH % 2 == 1, "odd square kernel expected"
    assert stride == 1 and dilation == 1, "stride=1, dilation=1 config"
    pad = (KH - 1) // 2 if same_padding else 0
    Ho = H + 2 * pad - KH + 1
    Wo = W + 2 * pad - KW + 1
    K = W * Cin                 # input row length
    M = Wo * Cout               # output row length (lane-dense)

    # w_mat[kh*K + w_in*Cin + cin, w_out*Cout + cout] = w[cout, cin, kh, kw]
    #   iff w_in == w_out + kw - pad (0 otherwise -> implicit W zero-padding).
    w_hwio = jnp.transpose(w_oihw.astype(jnp.float32), (2, 3, 1, 0))  # (KH,KW,Cin,Cout)
    w_in = np.arange(W)[:, None, None]
    kw_i = np.arange(KW)[None, :, None]
    w_out = np.arange(Wo)[None, None, :]
    onehot = (w_in == w_out + kw_i - pad).astype(np.float32)          # (W,KW,Wo), static
    w_mat = jnp.einsum('pkw,hkic->hpiwc', jnp.asarray(onehot), w_hwio)
    w_mat = w_mat.reshape(KH * K, M).astype(operand_dtype)

    # Bias tiled to the lane-dense layout: b_row[0, w*Cout + c] = bias[c].
    b_row = jnp.tile(bias.astype(jnp.float32), Wo).reshape(1, M)

    geom = dict(Cin=Cin, Cout=Cout, KH=KH, KW=KW, pad=pad,
                H=H, W=W, Ho=Ho, Wo=Wo, K=K, M=M)
    return w_mat, b_row, geom


# --------------------------------------------------------------------------
# Lane-dense forward: (N, H, W*Cin) -> (N, Ho, Wo*Cout).
# Chained SASNet layers should stay in this layout.
# --------------------------------------------------------------------------
def conv2d_relu_rows(x_rows, w_mat, b_row, geom, *, out_dtype=jnp.float32):
    N, H, K = x_rows.shape
    assert H == geom['H'] and K == geom['K']
    KH, pad, Ho, M = geom['KH'], geom['pad'], geom['Ho'], geom['M']
    KHK = KH * K
    NHo = N * Ho

    # im2row slab: pad H only (W padding lives in the weight matrix), then
    # concat the KH overlapping H-windows along the last dim.
    x_pad = jnp.pad(x_rows, ((0, 0), (pad, pad), (0, 0)))
    slab = jnp.concatenate([x_pad[:, kh:kh + Ho, :] for kh in range(KH)],
                           axis=-1)                       # (N, Ho, KH*K)
    slab = slab.reshape(NHo, KHK).astype(w_mat.dtype)     # bf16 operands

    Cin, Cout, KW, Wo = geom['Cin'], geom['Cout'], geom['KW'], geom['Wo']
    cost = pl.CostEstimate(
        flops=2 * N * Cout * Ho * Wo * Cin * KH * KW,     # useful conv FLOPs
        transcendentals=0,
        bytes_accessed=(2 * (NHo * KHK + KHK * M)         # bf16 slab + weights
                        + 4 * (M + NHo * M)),             # f32 bias + output
    )

    out_rows = pl.pallas_call(
        _conv_relu_kernel,
        out_shape=jax.ShapeDtypeStruct((NHo, M), out_dtype),
        grid=(1,),                                        # whole (tiny) problem in one step
        in_specs=[
            pl.BlockSpec((NHo, KHK), lambda i: (0, 0)),
            pl.BlockSpec((KHK, M), lambda i: (0, 0)),
            pl.BlockSpec((1, M), lambda i: (0, 0)),
        ],
        out_specs=pl.BlockSpec((NHo, M), lambda i: (0, 0)),
        compiler_params=pltpu.CompilerParams(
            dimension_semantics=("arbitrary",)),
        cost_estimate=cost,
    )(slab, w_mat, b_row)

    return out_rows.reshape(N, Ho, M)


# --------------------------------------------------------------------------
# Boundary wrapper: NCHW in / NCHW out (matches the PyTorch module).
# --------------------------------------------------------------------------
@functools.partial(jax.jit, static_argnames=('geom_key',))
def _rows_forward_jit(x_rows, w_mat, b_row, geom_key):
    geom = dict(geom_key)
    return conv2d_relu_rows(x_rows, w_mat, b_row, geom)


def conv2d_relu_nchw(x_nchw, w_mat, b_row, geom):
    N, Cin, H, W = x_nchw.shape
    assert Cin == geom['Cin'] and H == geom['H'] and W == geom['W']
    # NCHW -> lane-dense rows (N, H, W*Cin). Only at the network boundary.
    x_rows = jnp.transpose(x_nchw, (0, 2, 3, 1)).reshape(N, H, geom['K'])
    out_rows = _rows_forward_jit(x_rows, w_mat, b_row,
                                 tuple(sorted(geom.items())))
    # (N, Ho, Wo*Cout) -> (N, Cout, Ho, Wo).
    out = out_rows.reshape(N, geom['Ho'], geom['Wo'], geom['Cout'])
    return jnp.transpose(out, (0, 3, 1, 2))


if __name__ == "__main__":
    # Module config: Conv2d(4, 8, 3, stride=1, NL='relu', same_padding=True, bn=False)
    in_channels, out_channels, kernel_size = 4, 8, 3
    N, H, W = 2, 16, 16

    key = jax.random.PRNGKey(0)
    kx, kw, kb = jax.random.split(key, 3)
    x = jax.random.normal(kx, (N, in_channels, H, W), jnp.float32)
    fan_in = in_channels * kernel_size * kernel_size
    bound = 1.0 / np.sqrt(fan_in)
    w = jax.random.uniform(kw, (out_channels, in_channels, kernel_size, kernel_size),
                           jnp.float32, -bound, bound)
    b = jax.random.uniform(kb, (out_channels,), jnp.float32, -bound, bound)

    # One-time weight preparation (hoisted out of the forward path).
    w_mat, b_row, geom = make_conv2d_relu_params(
        w, b, H, W, same_padding=True, stride=1, dilation=1)

    out = conv2d_relu_nchw(x, w_mat, b_row, geom)
    out = jax.block_until_ready(out)

    # Reference check against XLA conv (same semantics as torch Conv2d + ReLU).
    # Tolerance loosened: operands are bf16 (f32 accumulation).
    ref = jax.lax.conv_general_dilated(
        x, w, window_strides=(1, 1), padding="SAME",
        dimension_numbers=("NCHW", "OIHW", "NCHW"))
    ref = jnp.maximum(ref + b.reshape(1, -1, 1, 1), 0.0)
    np.testing.assert_allclose(np.asarray(out), np.asarray(ref),
                               rtol=2e-2, atol=2e-2)

    print("KERNEL_OK")
</pallas_src>

<mosaic_0001>
module attributes {stable_mosaic.version = 11 : i64} {
  func.func @_conv_relu_kernel(%arg0: i32, %arg1: memref<32x192xbf16, #tpu.memory_space<vmem>>, %arg2: memref<192x128xbf16, #tpu.memory_space<vmem>>, %arg3: memref<1x128xf32, #tpu.memory_space<vmem>>, %arg4: memref<32x128xf32, #tpu.memory_space<vmem>>) attributes {dimension_semantics = [#tpu.dimension_semantics<arbitrary>], iteration_bounds = array<i64: 1>, scalar_prefetch = 0 : i64, scratch_operands = 0 : i64, tpu.core_type = #tpu.core_type<tc>, window_params = [{pipeline_mode = #tpu.pipeline_mode<synchronous>, transform_indices = @transform_0, window_bounds = array<i64: 32, 192>}, {pipeline_mode = #tpu.pipeline_mode<synchronous>, transform_indices = @transform_1, window_bounds = array<i64: 192, 128>}, {pipeline_mode = #tpu.pipeline_mode<synchronous>, transform_indices = @transform_2, window_bounds = array<i64: 1, 128>}, {pipeline_mode = #tpu.pipeline_mode<synchronous>, transform_indices = @transform_3, window_bounds = array<i64: 32, 128>}]} {
    %c0 = arith.constant 0 : index
    %c0_0 = arith.constant 0 : index
    %0 = vector.load %arg1[%c0, %c0_0] : memref<32x192xbf16, #tpu.memory_space<vmem>>, vector<32x192xbf16>
    %c0_1 = arith.constant 0 : index
    %c0_2 = arith.constant 0 : index
    %1 = vector.load %arg2[%c0_1, %c0_2] : memref<192x128xbf16, #tpu.memory_space<vmem>>, vector<192x128xbf16>
    %cst = arith.constant dense<0.000000e+00> : vector<32x128xf32>
    %2 = tpu.matmul %0, %1, %cst {dimension_numbers = #tpu.dot_dimension_numbers<[1], [0], [0], [1], [0, 0, 1, 1], [], []>} : vector<32x192xbf16>, vector<192x128xbf16>, vector<32x128xf32> -> vector<32x128xf32>
    %c0_3 = arith.constant 0 : index
    %c0_4 = arith.constant 0 : index
    %3 = vector.load %arg3[%c0_3, %c0_4] : memref<1x128xf32, #tpu.memory_space<vmem>>, vector<1x128xf32>
    %4 = vector.shape_cast %3 : vector<1x128xf32> to vector<1x128xf32>
    %5 = vector.broadcast %4 : vector<1x128xf32> to vector<32x128xf32>
    %6 = arith.addf %2, %5 : vector<32x128xf32>
    %cst_5 = arith.constant 0.000000e+00 : f32
    %7 = vector.broadcast %cst_5 : f32 to vector<32x128xf32>
    %8 = arith.maximumf %6, %7 : vector<32x128xf32>
    %c0_6 = arith.constant 0 : index
    %c0_7 = arith.constant 0 : index
    %9 = vector.load %arg4[%c0_6, %c0_7] : memref<32x128xf32, #tpu.memory_space<vmem>>, vector<32x128xf32>
    tpu.vector_store %arg4[%c0_6, %c0_7], %8 {strides = array<i32>} : memref<32x128xf32, #tpu.memory_space<vmem>>, vector<32x128xf32>,
    return
  }
  func.func @transform_0(%arg0: i32) -> (i32, i32) {
    %c0_i32 = arith.constant 0 : i32
    %c0_i32_0 = arith.constant 0 : i32
    %c0_i32_1 = arith.constant 0 : i32
    return %c0_i32, %c0_i32_0 : i32, i32
  }
  func.func @transform_1(%arg0: i32) -> (i32, i32) {
    %c0_i32 = arith.constant 0 : i32
    %c0_i32_0 = arith.constant 0 : i32
    %c0_i32_1 = arith.constant 0 : i32
    return %c0_i32, %c0_i32_0 : i32, i32
  }
  func.func @transform_2(%arg0: i32) -> (i32, i32) {
    %c0_i32 = arith.constant 0 : i32
    %c0_i32_0 = arith.constant 0 : i32
    %c0_i32_1 = arith.constant 0 : i32
    return %c0_i32, %c0_i32_0 : i32, i32
  }
  func.func @transform_3(%arg0: i32) -> (i32, i32) {
    %c0_i32 = arith.constant 0 : i32
    %c0_i32_0 = arith.constant 0 : i32
    %c0_i32_1 = arith.constant 0 : i32
    return %c0_i32, %c0_i32_0 : i32, i32
  }
}

</mosaic_0001>

<llo_original>
// kernel: _rows_forward_jit.1
$region0: #{_rows_forward_jit.1}
  #allocation0 [shape = 'u32[]', space=smem, size = 0x4, offset = 0x4, fixed_abs, tag = 'smem constant byte address 0x4 - core index']
  #allocation1 [shape = 'u32[144,128]{1,0:T(1,128)}', space=vmem, size = 0x12000, scoped, tag = 'internal scratch']
  %s0 = inlined_call_operand.vmem [shape: bf16[32,192], index: 0, kind: input, shape index: {}]
  %s1 = inlined_call_operand.vmem [shape: bf16[192,128], index: 1, kind: input, shape index: {}]
  %s2 = inlined_call_operand.vmem [shape: f32[1,128], index: 2, kind: input, shape index: {}]
  %s3 = inlined_call_operand.hbm [shape: f32[32,128], index: 3, kind: output, shape index: {}]
  %s4 = sld [smem:[#allocation0]]
  $region22: #{_rows_forward_jit.1} parent=0
    _
  %s6 = ssub.s32 1, %s4
  %s7 = scalar_select 0, %s6, %s4
  $region1: #{_rows_forward_jit.1} parent=0
    #allocation2 [shape = 'u8[16384]{0}', space=vmem, size = 0x4000, scoped, tag = 'output window, operand 0, single buffered']
    #allocation3 [shape = 's32[1]{0}', space=sflag, size = 0x4, scoped, tag = 'scoped memory for _rows_forward_jit.1']
    %8 = vsyncpa [#allocation3], 0
    // Predicated region
    $region2: #{_rows_forward_jit.1} parent=1 // pred_check
      _
    $region3: #{_rows_forward_jit.1} parent=1 // pred_check_branch
      %10 = sbr.rel (0) target = $region5
    $region4: #{_rows_forward_jit.1} parent=1 // pred_region
      _
    $region5: #{_rows_forward_jit.1} parent=1 // pred_fallthru
      _
    // Predicated region
    $region6: #{_rows_forward_jit.1} parent=1 // pred_check
      _
    $region7: #{_rows_forward_jit.1} parent=1 // pred_check_branch
      %12 = sbr.rel (0) target = $region9
    $region8: #{_rows_forward_jit.1} parent=1 // pred_region
      _
    $region9: #{_rows_forward_jit.1} parent=1 // pred_fallthru
      _
    // Predicated region
    $region10: #{_rows_forward_jit.1} parent=1 // pred_check
      _
    $region11: #{_rows_forward_jit.1} parent=1 // pred_check_branch
      %14 = sbr.rel (0) target = $region13
    $region12: #{_rows_forward_jit.1} parent=1 // pred_region
      _
    $region13: #{_rows_forward_jit.1} parent=1 // pred_fallthru
      _
    %v16 = vld [vmem:[%s0] sm:$0xff]
    %v17 = vld [vmem:[%s0 + $0x8] sm:$0xff]
    %v18 = vld [vmem:[%s0 + $0x10] sm:$0xff]
    %v19 = vld [vmem:[%s0 + $0x18] sm:$0xff]
    %v20 = vld [vmem:[%s1] sm:$0xf]
    %v21 = vld [vmem:[%s1 + $0x4] sm:$0xf]
    %v22 = vld [vmem:[%s1 + $0x8] sm:$0xf]
    %v23 = vld [vmem:[%s1 + $0xc] sm:$0xf]
    %v24 = vld [vmem:[%s1 + $0x10] sm:$0xf]
    %v25 = vld [vmem:[%s1 + $0x14] sm:$0xf]
    %v26 = vld [vmem:[%s1 + $0x18] sm:$0xf]
    %v27 = vld [vmem:[%s1 + $0x1c] sm:$0xf]
    %v28 = vld [vmem:[%s1 + $0x20] sm:$0xf]
    %v29 = vld [vmem:[%s1 + $0x24] sm:$0xf]
    %v30 = vld [vmem:[%s1 + $0x28] sm:$0xf]
    %v31 = vld [vmem:[%s1 + $0x2c] sm:$0xf]
    %v32 = vld [vmem:[%s1 + $0x30] sm:$0xf]
    %v33 = vld [vmem:[%s1 + $0x34] sm:$0xf]
    %v34 = vld [vmem:[%s1 + $0x38] sm:$0xf]
    %v35 = vld [vmem:[%s1 + $0x3c] sm:$0xf]
    %v36 = vld [vmem:[%s1 + $0x40] sm:$0xf]
    %v37 = vld [vmem:[%s1 + $0x44] sm:$0xf]
    %v38 = vld [vmem:[%s1 + $0x48] sm:$0xf]
    %v39 = vld [vmem:[%s1 + $0x4c] sm:$0xf]
    %v40 = vld [vmem:[%s1 + $0x50] sm:$0xf]
    %v41 = vld [vmem:[%s1 + $0x54] sm:$0xf]
    %v42 = vld [vmem:[%s1 + $0x58] sm:$0xf]
    %v43 = vld [vmem:[%s1 + $0x5c] sm:$0xf]
    %v44 = vld [vmem:[%s2] sm:$0x1]
    %v46 = vlaneseq
    %v47 = vshrl.u32 %v46, 7
    %v48 = vsub.s32 0, %v47
    %v49 = vrot.slane %v44, %v48
    %v55 = vunpack.c.l.b16 %v16
    %v56 = vunpack.c.h.b16 %v16
    %v57 = vunpack.c.l.b16 %v17
    %v58 = vunpack.c.h.b16 %v17
    %v59 = vunpack.c.l.b16 %v18
    %v60 = vunpack.c.h.b16 %v18
    %v61 = vunpack.c.l.b16 %v19
    %v62 = vunpack.c.h.b16 %v19
    %v63 = vpack.c.b16 %v57, %v55
    %v64 = vpack.c.b16 %v58, %v56
    %v65 = vpack.c.b16 %v61, %v59
    %v66 = vpack.c.b16 %v62, %v60
    %v93 = vunpack.c.l.b16 %v20
    %v94 = vunpack.c.l.b16 %v21
    %v95 = vunpack.c.l.b16 %v22
    %v96 = vunpack.c.l.b16 %v23
    %v97 = vunpack.c.l.b16 %v24
    %v98 = vunpack.c.l.b16 %v25
    %v99 = vunpack.c.l.b16 %v26
    %v100 = vunpack.c.l.b16 %v27
    %v101 = vunpack.c.l.b16 %v28
    %v102 = vunpack.c.l.b16 %v29
    %v103 = vunpack.c.l.b16 %v30
    %v104 = vunpack.c.l.b16 %v31
    %v105 = vunpack.c.l.b16 %v32
    %v106 = vunpack.c.l.b16 %v33
    %v107 = vunpack.c.l.b16 %v34
    %v108 = vunpack.c.l.b16 %v35
    %v109 = vunpack.c.l.b16 %v36
    %v110 = vunpack.c.l.b16 %v37
    %v111 = vunpack.c.l.b16 %v38
    %v112 = vunpack.c.l.b16 %v39
    %v113 = vunpack.c.l.b16 %v40
    %v114 = vunpack.c.l.b16 %v41
    %v115 = vunpack.c.l.b16 %v42
    %v116 = vunpack.c.l.b16 %v43
    %v117 = vpack.c.b16 %v94, %v93
    %v118 = vpack.c.b16 %v96, %v95
    %v119 = vpack.c.b16 %v98, %v97
    %v120 = vpack.c.b16 %v100, %v99
    %v121 = vpack.c.b16 %v102, %v101
    %v122 = vpack.c.b16 %v104, %v103
    %v123 = vpack.c.b16 %v106, %v105
    %v124 = vpack.c.b16 %v108, %v107
    %v125 = vpack.c.b16 %v110, %v109
    %v126 = vpack.c.b16 %v112, %v111
    %v127 = vpack.c.b16 %v114, %v113
    %v128 = vpack.c.b16 %v116, %v115
    %vm141 = vcmask 523264
    %v143 = vsel %vm141, %v64, 0
    %v146 = vsel %vm141, %v66, 0
    %148 = vmatprep.subr.bf16.mxu0 0
    %149 = vmatpush1.bf16.msra.mxu0 %v117
    %150 = vmatprep.subr.bf16.mxu0 0
    %151 = vmatpush1.bf16.msra.mxu0 %v118
    %152 = vmatprep.subr.bf16.mxu0 0
    %153 = vmatpush1.bf16.msra.mxu0 %v119
    %154 = vmatprep.subr.bf16.mxu0 0
    %155 = vmatpush1.bf16.msra.mxu0 %v120
    %156 = vmatprep.subr.bf16.mxu0 0
    %157 = vmatpush1.bf16.msra.mxu0 %v121
    %158 = vmatprep.subr.bf16.mxu0 0
    %159 = vmatpush1.bf16.msra.mxu0 %v122
    %160 = vmatprep.subr.bf16.mxu0 0
    %161 = vmatpush1.bf16.msra.mxu0 %v123
    %162 = vmatprep.subr.bf16.mxu0 0
    %163 = vmatpush1.bf16.msra.mxu0 %v124
    %164 = vmatprep.subr.bf16.mxu0 0
    %165 = vmatpush1.bf16.msra.mxu0 %v125
    %166 = vmatprep.subr.bf16.mxu0 0
    %167 = vmatpush1.bf16.msra.mxu0 %v126
    %168 = vmatprep.subr.bf16.mxu0 0
    %169 = vmatpush1.bf16.msra.mxu0 %v127
    %170 = vmatprep.subr.bf16.mxu0 0
    %171 = vmatpush1.bf16.msra.mxu0 %v128
    %172 = vmatprep.subr.bf16.mxu0 0
    %173 = vmatpush1.bf16.msra.mxu0 0
    %174 = vmatprep.subr.bf16.mxu0 0
    %175 = vmatpush1.bf16.msra.mxu0 0
    %176 = vmatprep.subr.bf16.mxu0 0
    %177 = vmatpush1.bf16.msra.mxu0 0
    %178 = vmatprep.subr.bf16.mxu0 0
    %179 = vmatpush1.bf16.msra.mxu0 0
    %180 = vmatprep.mubr.bf16.mxu0 %v143
    %181 = vmatmul.mubr.bf16.gmra.mrb[0].mxu0 %v63
    %v182 = vpop.f32.mrb[0].mxu0
    %v183 = vadd.f32 %v49, %v182
    %v184 = vpop.f32.mrb[0].mxu0
    %v185 = vpop.f32.mrb[0].mxu0
    %v186 = vadd.f32 %v49, %v185
    %v187 = vpop.f32.mrb[0].mxu0
    %188 = vmatprep.mubr.bf16.mxu0 %v146
    %189 = vmatmul.mubr.bf16.gmra.mrb[0].mxu0 %v65
    %v190 = vpop.f32.mrb[0].mxu0
    %v191 = vadd.f32 %v49, %v190
    %v192 = vpop.f32.mrb[0].mxu0
    %v193 = vpop.f32.mrb[0].mxu0
    %v194 = vadd.f32 %v49, %v193
    %v195 = vpop.f32.mrb[0].mxu0
    %196 = vdwg.mxu0
    %v197 = vmax.f32 %v183, 0.0
    %v198 = vmax.f32 %v186, 0.0
    %v199 = vmax.f32 %v191, 0.0
    %v200 = vmax.f32 %v194, 0.0
    %201 = vst [vmem:[#allocation2] sm:$0xff] %v197
    %202 = vst [vmem:[#allocation2 + $0x8] sm:$0xff] %v198
    %203 = vst [vmem:[#allocation2 + $0x10] sm:$0xff] %v199
    %204 = vst [vmem:[#allocation2 + $0x18] sm:$0xff] %v200
    // Predicated region
    $region14: #{_rows_forward_jit.1} parent=1 // pred_check
      _
    $region15: #{_rows_forward_jit.1} parent=1 // pred_check_branch
      %206 = sbr.rel (0) target = $region17
    $region16: #{_rows_forward_jit.1} parent=1 // pred_region
      %s208 = ssub.s32 512, 512
      %209 = vsyncadd [#allocation3], %s208
      %s210 = sshll.u32 [#allocation2], 4
      %s211 = int_to_ptr.vmem [resolvable:$true] %s210
      %216 = dma.vmem_to_hbm [thread:$0]  %s211, 512, %s3, [#allocation3], 128, 128, 8
    $region17: #{_rows_forward_jit.1} parent=1 // pred_fallthru
      _
    // Predicated region
    $region18: #{_rows_forward_jit.1} parent=1 // pred_check
      _
    $region19: #{_rows_forward_jit.1} parent=1 // pred_check_branch
      %218 = sbr.rel (0) target = $region21
    $region20: #{_rows_forward_jit.1} parent=1 // pred_region
      %219 = dma.done [#allocation3], 512
    $region21: #{_rows_forward_jit.1} parent=1 // pred_fallthru
      _
    %220 = vsyncpa [#allocation3], 1

</llo_original>
